<compile_context>
chip_gen: v7x
topology: tpu7x:2x2x1
jax: 0.10.0
libtpu: 0.0.40
codegen_flags: <defaults>
</compile_context>

<pallas_src>
import functools

import jax
import jax.numpy as jnp
from jax.experimental import pallas as pl
from jax.experimental.pallas import tpu as pltpu

# ---- config (consistent with the module: embedding_dim, fc dims) ----
EMBEDDING_DIM = 32          # config.embedding_dim
FIRST_FC_HIDDEN_DIM = 64    # config.first_fc_hidden_dim
SECOND_FC_HIDDEN_DIM = 64   # config.second_fc_hidden_dim
FC1_IN_DIM = 320            # hard-coded in the module
NUM_PUBLISHER = 64          # item_dbook embedding table size (synthetic)
NUM_LOCATION = 128          # user_dbook embedding table size (synthetic)
BATCH = 8
BATCH_TILE = 8              # rows gathered per grid step


def _dual_emb_gather_kernel(ids_ref, item_tbl_ref, user_tbl_ref, out_ref, *,
                            batch_tile, total_batch, emb_dim):
    """Dual-embedding row gather driven by SMEM scalar-prefetch ids.

    ids_ref      : (2*total_batch,) int32, SMEM.  [pub ids | loc ids],
                   pre-clamped to valid table rows by the wrapper.
    item_tbl_ref : (num_pub, D) f32, VMEM (loaded once, constant index_map).
    user_tbl_ref : (num_loc, D) f32, VMEM (loaded once, constant index_map).
    out_ref      : (batch_tile, 2*D) f32, VMEM — lane-dense [item | user] slab.
    """
    base = pl.program_id(0) * batch_tile
    # Static unroll over the (small) batch tile: per row, two SMEM scalar
    # reads, two dynamic-row vector loads, two static-offset stores into the
    # 64-lane output slab.  O(B*D) total — no one-hot mask, no MXU pass.
    for r in range(batch_tile):
        pub = ids_ref[base + r]
        loc = ids_ref[total_batch + base + r]
        out_ref[pl.ds(r, 1), pl.ds(0, emb_dim)] = item_tbl_ref[pl.ds(pub, 1), :]
        out_ref[pl.ds(r, 1), pl.ds(emb_dim, emb_dim)] = (
            user_tbl_ref[pl.ds(loc, 1), :])


def init_params(key):
    """Deterministic parameter init matching the module's __init__ shapes."""
    k = jax.random.split(key, 8)
    params = {
        "item_emb": jax.random.normal(
            k[0], (NUM_PUBLISHER, EMBEDDING_DIM), jnp.float32) * 0.1,
        "user_emb": jax.random.normal(
            k[1], (NUM_LOCATION, EMBEDDING_DIM), jnp.float32) * 0.1,
        # fc1 / fc2 / linear_out — declared in __init__, unused in forward()
        "fc1_w": jax.random.normal(k[2], (FIRST_FC_HIDDEN_DIM, FC1_IN_DIM),
                                   jnp.float32) * 0.05,
        "fc1_b": jnp.zeros((FIRST_FC_HIDDEN_DIM,), jnp.float32),
        "fc2_w": jax.random.normal(k[3], (SECOND_FC_HIDDEN_DIM,
                                          FIRST_FC_HIDDEN_DIM),
                                   jnp.float32) * 0.05,
        "fc2_b": jnp.zeros((SECOND_FC_HIDDEN_DIM,), jnp.float32),
        "out_w": jax.random.normal(k[4], (1, SECOND_FC_HIDDEN_DIM),
                                   jnp.float32) * 0.05,
        "out_b": jnp.zeros((1,), jnp.float32),
    }
    return params


def user_preference_estimator_dbook_forward(x, params):
    """x: (B, F) int feature matrix; columns 0 and 2 are publisher/location ids.

    Returns (item_emb, user_emb), each (B, EMBEDDING_DIM) float32 — exactly the
    tuple the PyTorch forward returns.
    """
    item_tbl = params["item_emb"]            # (num_pub, D)
    user_tbl = params["user_emb"]            # (num_loc, D)
    b = x.shape[0]
    d = item_tbl.shape[1]

    tb = min(BATCH_TILE, b)
    padded_b = pl.cdiv(b, tb) * tb

    # Id extraction + clamp (bounds derived from the table shapes, matching
    # jnp.take's 'clip' mode under jit). Tiny host-side XLA ops feeding SMEM.
    x = x.astype(jnp.int32)
    pub = jnp.clip(x[:, 0], 0, item_tbl.shape[0] - 1)
    loc = jnp.clip(x[:, 2], 0, user_tbl.shape[0] - 1)
    if padded_b != b:
        pad = padded_b - b
        pub = jnp.pad(pub, (0, pad))
        loc = jnp.pad(loc, (0, pad))
    ids = jnp.concatenate([pub, loc]).astype(jnp.int32)   # (2*padded_b,)

    kernel = functools.partial(
        _dual_emb_gather_kernel,
        batch_tile=tb, total_batch=padded_b, emb_dim=d)

    fused_out = pl.pallas_call(
        kernel,
        out_shape=jax.ShapeDtypeStruct((padded_b, 2 * d), jnp.float32),
        grid_spec=pltpu.PrefetchScalarGridSpec(
            num_scalar_prefetch=1,                     # ids -> SMEM
            grid=(padded_b // tb,),
            in_specs=[
                # Tables: full block, constant index_map -> DMA'd once and
                # VMEM-resident across all batch-tile grid steps.
                pl.BlockSpec((item_tbl.shape[0], d), lambda i, ids: (0, 0)),
                pl.BlockSpec((user_tbl.shape[0], d), lambda i, ids: (0, 0)),
            ],
            out_specs=pl.BlockSpec((tb, 2 * d), lambda i, ids: (i, 0)),
        ),
        compiler_params=pltpu.CompilerParams(
            dimension_semantics=("parallel",)),        # 2x on v7x dual-TC
    )(ids, item_tbl, user_tbl)

    fused_out = fused_out[:b]
    item_emb = fused_out[:, :d]
    user_emb = fused_out[:, d:]
    return item_emb, user_emb


if __name__ == "__main__":
    key = jax.random.PRNGKey(0)
    params = init_params(key)

    # x: (B, 4) integer features; column 0 = publisher id, column 2 = location id
    kx = jax.random.split(key, 4)
    col_pub = jax.random.randint(kx[0], (BATCH, 1), 0, NUM_PUBLISHER)
    col_other = jax.random.randint(kx[1], (BATCH, 1), 0, 10)
    col_loc = jax.random.randint(kx[2], (BATCH, 1), 0, NUM_LOCATION)
    col_extra = jax.random.randint(kx[3], (BATCH, 1), 0, 10)
    x = jnp.concatenate([col_pub, col_other, col_loc, col_extra],
                        axis=1).astype(jnp.int32)

    item_emb, user_emb = user_preference_estimator_dbook_forward(x, params)
    jax.block_until_ready((item_emb, user_emb))

    # Reference check against plain JAX embedding lookup.
    ref_item = jnp.take(params["item_emb"], x[:, 0], axis=0)
    ref_user = jnp.take(params["user_emb"], x[:, 2], axis=0)
    assert item_emb.shape == (BATCH, EMBEDDING_DIM)
    assert user_emb.shape == (BATCH, EMBEDDING_DIM)
    assert jnp.allclose(item_emb, ref_item, atol=1e-6)
    assert jnp.allclose(user_emb, ref_user, atol=1e-6)

    print("KERNEL_OK")
</pallas_src>

<mosaic_0001>
module attributes {stable_mosaic.version = 11 : i64} {
  func.func @_dual_emb_gather_kernel(%arg0: i32, %arg1: memref<16xi32, #tpu.memory_space<smem>>, %arg2: memref<64x32xf32, #tpu.memory_space<vmem>>, %arg3: memref<128x32xf32, #tpu.memory_space<vmem>>, %arg4: memref<8x64xf32, #tpu.memory_space<vmem>>) attributes {dimension_semantics = [#tpu.dimension_semantics<parallel>], iteration_bounds = array<i64: 1>, scalar_prefetch = 1 : i64, scratch_operands = 0 : i64, tpu.core_type = #tpu.core_type<tc>, window_params = [{pipeline_mode = #tpu.pipeline_mode<synchronous>, transform_indices = @transform_0, window_bounds = array<i64: 64, 32>}, {pipeline_mode = #tpu.pipeline_mode<synchronous>, transform_indices = @transform_1, window_bounds = array<i64: 128, 32>}, {transform_indices = @transform_2, window_bounds = array<i64: 8, 64>}]} {
    %c8_i32 = arith.constant 8 : i32
    %0 = arith.muli %arg0, %c8_i32 : i32
    %c0_i32 = arith.constant 0 : i32
    %1 = arith.addi %0, %c0_i32 : i32
    %2 = arith.index_cast %1 : i32 to index
    %3 = memref.load %arg1[%2] : memref<16xi32, #tpu.memory_space<smem>>
    %c8_i32_0 = arith.constant 8 : i32
    %4 = arith.addi %c8_i32_0, %0 : i32
    %c0_i32_1 = arith.constant 0 : i32
    %5 = arith.addi %4, %c0_i32_1 : i32
    %6 = arith.index_cast %5 : i32 to index
    %7 = memref.load %arg1[%6] : memref<16xi32, #tpu.memory_space<smem>>
    %8 = arith.index_cast %3 : i32 to index
    %c0 = arith.constant 0 : index
    %9 = vector.load %arg2[%8, %c0] : memref<64x32xf32, #tpu.memory_space<vmem>>, vector<1x32xf32>
    %c0_2 = arith.constant 0 : index
    %c0_3 = arith.constant 0 : index
    %10 = vector.load %arg4[%c0_2, %c0_3] : memref<8x64xf32, #tpu.memory_space<vmem>>, vector<1x32xf32>
    tpu.vector_store %arg4[%c0_2, %c0_3], %9 {strides = array<i32>} : memref<8x64xf32, #tpu.memory_space<vmem>>, vector<1x32xf32>,
    %11 = arith.index_cast %7 : i32 to index
    %c0_4 = arith.constant 0 : index
    %12 = vector.load %arg3[%11, %c0_4] : memref<128x32xf32, #tpu.memory_space<vmem>>, vector<1x32xf32>
    %c0_5 = arith.constant 0 : index
    %c32 = arith.constant 32 : index
    %13 = vector.load %arg4[%c0_5, %c32] : memref<8x64xf32, #tpu.memory_space<vmem>>, vector<1x32xf32>
    tpu.vector_store %arg4[%c0_5, %c32], %12 {strides = array<i32>} : memref<8x64xf32, #tpu.memory_space<vmem>>, vector<1x32xf32>,
    %c1_i32 = arith.constant 1 : i32
    %14 = arith.addi %0, %c1_i32 : i32
    %15 = arith.index_cast %14 : i32 to index
    %16 = memref.load %arg1[%15] : memref<16xi32, #tpu.memory_space<smem>>
    %c8_i32_6 = arith.constant 8 : i32
    %17 = arith.addi %c8_i32_6, %0 : i32
    %c1_i32_7 = arith.constant 1 : i32
    %18 = arith.addi %17, %c1_i32_7 : i32
    %19 = arith.index_cast %18 : i32 to index
    %20 = memref.load %arg1[%19] : memref<16xi32, #tpu.memory_space<smem>>
    %21 = arith.index_cast %16 : i32 to index
    %c0_8 = arith.constant 0 : index
    %22 = vector.load %arg2[%21, %c0_8] : memref<64x32xf32, #tpu.memory_space<vmem>>, vector<1x32xf32>
    %c1 = arith.constant 1 : index
    %c0_9 = arith.constant 0 : index
    %23 = vector.load %arg4[%c1, %c0_9] : memref<8x64xf32, #tpu.memory_space<vmem>>, vector<1x32xf32>
    tpu.vector_store %arg4[%c1, %c0_9], %22 {strides = array<i32>} : memref<8x64xf32, #tpu.memory_space<vmem>>, vector<1x32xf32>,
    %24 = arith.index_cast %20 : i32 to index
    %c0_10 = arith.constant 0 : index
    %25 = vector.load %arg3[%24, %c0_10] : memref<128x32xf32, #tpu.memory_space<vmem>>, vector<1x32xf32>
    %c1_11 = arith.constant 1 : index
    %c32_12 = arith.constant 32 : index
    %26 = vector.load %arg4[%c1_11, %c32_12] : memref<8x64xf32, #tpu.memory_space<vmem>>, vector<1x32xf32>
    tpu.vector_store %arg4[%c1_11, %c32_12], %25 {strides = array<i32>} : memref<8x64xf32, #tpu.memory_space<vmem>>, vector<1x32xf32>,
    %c2_i32 = arith.constant 2 : i32
    %27 = arith.addi %0, %c2_i32 : i32
    %28 = arith.index_cast %27 : i32 to index
    %29 = memref.load %arg1[%28] : memref<16xi32, #tpu.memory_space<smem>>
    %c8_i32_13 = arith.constant 8 : i32
    %30 = arith.addi %c8_i32_13, %0 : i32
    %c2_i32_14 = arith.constant 2 : i32
    %31 = arith.addi %30, %c2_i32_14 : i32
    %32 = arith.index_cast %31 : i32 to index
    %33 = memref.load %arg1[%32] : memref<16xi32, #tpu.memory_space<smem>>
    %34 = arith.index_cast %29 : i32 to index
    %c0_15 = arith.constant 0 : index
    %35 = vector.load %arg2[%34, %c0_15] : memref<64x32xf32, #tpu.memory_space<vmem>>, vector<1x32xf32>
    %c2 = arith.constant 2 : index
    %c0_16 = arith.constant 0 : index
    %36 = vector.load %arg4[%c2, %c0_16] : memref<8x64xf32, #tpu.memory_space<vmem>>, vector<1x32xf32>
    tpu.vector_store %arg4[%c2, %c0_16], %35 {strides = array<i32>} : memref<8x64xf32, #tpu.memory_space<vmem>>, vector<1x32xf32>,
    %37 = arith.index_cast %33 : i32 to index
    %c0_17 = arith.constant 0 : index
    %38 = vector.load %arg3[%37, %c0_17] : memref<128x32xf32, #tpu.memory_space<vmem>>, vector<1x32xf32>
    %c2_18 = arith.constant 2 : index
    %c32_19 = arith.constant 32 : index
    %39 = vector.load %arg4[%c2_18, %c32_19] : memref<8x64xf32, #tpu.memory_space<vmem>>, vector<1x32xf32>
    tpu.vector_store %arg4[%c2_18, %c32_19], %38 {strides = array<i32>} : memref<8x64xf32, #tpu.memory_space<vmem>>, vector<1x32xf32>,
    %c3_i32 = arith.constant 3 : i32
    %40 = arith.addi %0, %c3_i32 : i32
    %41 = arith.index_cast %40 : i32 to index
    %42 = memref.load %arg1[%41] : memref<16xi32, #tpu.memory_space<smem>>
    %c8_i32_20 = arith.constant 8 : i32
    %43 = arith.addi %c8_i32_20, %0 : i32
    %c3_i32_21 = arith.constant 3 : i32
    %44 = arith.addi %43, %c3_i32_21 : i32
    %45 = arith.index_cast %44 : i32 to index
    %46 = memref.load %arg1[%45] : memref<16xi32, #tpu.memory_space<smem>>
    %47 = arith.index_cast %42 : i32 to index
    %c0_22 = arith.constant 0 : index
    %48 = vector.load %arg2[%47, %c0_22] : memref<64x32xf32, #tpu.memory_space<vmem>>, vector<1x32xf32>
    %c3 = arith.constant 3 : index
    %c0_23 = arith.constant 0 : index
    %49 = vector.load %arg4[%c3, %c0_23] : memref<8x64xf32, #tpu.memory_space<vmem>>, vector<1x32xf32>
    tpu.vector_store %arg4[%c3, %c0_23], %48 {strides = array<i32>} : memref<8x64xf32, #tpu.memory_space<vmem>>, vector<1x32xf32>,
    %50 = arith.index_cast %46 : i32 to index
    %c0_24 = arith.constant 0 : index
    %51 = vector.load %arg3[%50, %c0_24] : memref<128x32xf32, #tpu.memory_space<vmem>>, vector<1x32xf32>
    %c3_25 = arith.constant 3 : index
    %c32_26 = arith.constant 32 : index
    %52 = vector.load %arg4[%c3_25, %c32_26] : memref<8x64xf32, #tpu.memory_space<vmem>>, vector<1x32xf32>
    tpu.vector_store %arg4[%c3_25, %c32_26], %51 {strides = array<i32>} : memref<8x64xf32, #tpu.memory_space<vmem>>, vector<1x32xf32>,
    %c4_i32 = arith.constant 4 : i32
    %53 = arith.addi %0, %c4_i32 : i32
    %54 = arith.index_cast %53 : i32 to index
    %55 = memref.load %arg1[%54] : memref<16xi32, #tpu.memory_space<smem>>
    %c8_i32_27 = arith.constant 8 : i32
    %56 = arith.addi %c8_i32_27, %0 : i32
    %c4_i32_28 = arith.constant 4 : i32
    %57 = arith.addi %56, %c4_i32_28 : i32
    %58 = arith.index_cast %57 : i32 to index
    %59 = memref.load %arg1[%58] : memref<16xi32, #tpu.memory_space<smem>>
    %60 = arith.index_cast %55 : i32 to index
    %c0_29 = arith.constant 0 : index
    %61 = vector.load %arg2[%60, %c0_29] : memref<64x32xf32, #tpu.memory_space<vmem>>, vector<1x32xf32>
    %c4 = arith.constant 4 : index
    %c0_30 = arith.constant 0 : index
    %62 = vector.load %arg4[%c4, %c0_30] : memref<8x64xf32, #tpu.memory_space<vmem>>, vector<1x32xf32>
    tpu.vector_store %arg4[%c4, %c0_30], %61 {strides = array<i32>} : memref<8x64xf32, #tpu.memory_space<vmem>>, vector<1x32xf32>,
    %63 = arith.index_cast %59 : i32 to index
    %c0_31 = arith.constant 0 : index
    %64 = vector.load %arg3[%63, %c0_31] : memref<128x32xf32, #tpu.memory_space<vmem>>, vector<1x32xf32>
    %c4_32 = arith.constant 4 : index
    %c32_33 = arith.constant 32 : index
    %65 = vector.load %arg4[%c4_32, %c32_33] : memref<8x64xf32, #tpu.memory_space<vmem>>, vector<1x32xf32>
    tpu.vector_store %arg4[%c4_32, %c32_33], %64 {strides = array<i32>} : memref<8x64xf32, #tpu.memory_space<vmem>>, vector<1x32xf32>,
    %c5_i32 = arith.constant 5 : i32
    %66 = arith.addi %0, %c5_i32 : i32
    %67 = arith.index_cast %66 : i32 to index
    %68 = memref.load %arg1[%67] : memref<16xi32, #tpu.memory_space<smem>>
    %c8_i32_34 = arith.constant 8 : i32
    %69 = arith.addi %c8_i32_34, %0 : i32
    %c5_i32_35 = arith.constant 5 : i32
    %70 = arith.addi %69, %c5_i32_35 : i32
    %71 = arith.index_cast %70 : i32 to index
    %72 = memref.load %arg1[%71] : memref<16xi32, #tpu.memory_space<smem>>
    %73 = arith.index_cast %68 : i32 to index
    %c0_36 = arith.constant 0 : index
    %74 = vector.load %arg2[%73, %c0_36] : memref<64x32xf32, #tpu.memory_space<vmem>>, vector<1x32xf32>
    %c5 = arith.constant 5 : index
    %c0_37 = arith.constant 0 : index
    %75 = vector.load %arg4[%c5, %c0_37] : memref<8x64xf32, #tpu.memory_space<vmem>>, vector<1x32xf32>
    tpu.vector_store %arg4[%c5, %c0_37], %74 {strides = array<i32>} : memref<8x64xf32, #tpu.memory_space<vmem>>, vector<1x32xf32>,
    %76 = arith.index_cast %72 : i32 to index
    %c0_38 = arith.constant 0 : index
    %77 = vector.load %arg3[%76, %c0_38] : memref<128x32xf32, #tpu.memory_space<vmem>>, vector<1x32xf32>
    %c5_39 = arith.constant 5 : index
    %c32_40 = arith.constant 32 : index
    %78 = vector.load %arg4[%c5_39, %c32_40] : memref<8x64xf32, #tpu.memory_space<vmem>>, vector<1x32xf32>
    tpu.vector_store %arg4[%c5_39, %c32_40], %77 {strides = array<i32>} : memref<8x64xf32, #tpu.memory_space<vmem>>, vector<1x32xf32>,
    %c6_i32 = arith.constant 6 : i32
    %79 = arith.addi %0, %c6_i32 : i32
    %80 = arith.index_cast %79 : i32 to index
    %81 = memref.load %arg1[%80] : memref<16xi32, #tpu.memory_space<smem>>
    %c8_i32_41 = arith.constant 8 : i32
    %82 = arith.addi %c8_i32_41, %0 : i32
    %c6_i32_42 = arith.constant 6 : i32
    %83 = arith.addi %82, %c6_i32_42 : i32
    %84 = arith.index_cast %83 : i32 to index
    %85 = memref.load %arg1[%84] : memref<16xi32, #tpu.memory_space<smem>>
    %86 = arith.index_cast %81 : i32 to index
    %c0_43 = arith.constant 0 : index
    %87 = vector.load %arg2[%86, %c0_43] : memref<64x32xf32, #tpu.memory_space<vmem>>, vector<1x32xf32>
    %c6 = arith.constant 6 : index
    %c0_44 = arith.constant 0 : index
    %88 = vector.load %arg4[%c6, %c0_44] : memref<8x64xf32, #tpu.memory_space<vmem>>, vector<1x32xf32>
    tpu.vector_store %arg4[%c6, %c0_44], %87 {strides = array<i32>} : memref<8x64xf32, #tpu.memory_space<vmem>>, vector<1x32xf32>,
    %89 = arith.index_cast %85 : i32 to index
    %c0_45 = arith.constant 0 : index
    %90 = vector.load %arg3[%89, %c0_45] : memref<128x32xf32, #tpu.memory_space<vmem>>, vector<1x32xf32>
    %c6_46 = arith.constant 6 : index
    %c32_47 = arith.constant 32 : index
    %91 = vector.load %arg4[%c6_46, %c32_47] : memref<8x64xf32, #tpu.memory_space<vmem>>, vector<1x32xf32>
    tpu.vector_store %arg4[%c6_46, %c32_47], %90 {strides = array<i32>} : memref<8x64xf32, #tpu.memory_space<vmem>>, vector<1x32xf32>,
    %c7_i32 = arith.constant 7 : i32
    %92 = arith.addi %0, %c7_i32 : i32
    %93 = arith.index_cast %92 : i32 to index
    %94 = memref.load %arg1[%93] : memref<16xi32, #tpu.memory_space<smem>>
    %c8_i32_48 = arith.constant 8 : i32
    %95 = arith.addi %c8_i32_48, %0 : i32
    %c7_i32_49 = arith.constant 7 : i32
    %96 = arith.addi %95, %c7_i32_49 : i32
    %97 = arith.index_cast %96 : i32 to index
    %98 = memref.load %arg1[%97] : memref<16xi32, #tpu.memory_space<smem>>
    %99 = arith.index_cast %94 : i32 to index
    %c0_50 = arith.constant 0 : index
    %100 = vector.load %arg2[%99, %c0_50] : memref<64x32xf32, #tpu.memory_space<vmem>>, vector<1x32xf32>
    %c7 = arith.constant 7 : index
    %c0_51 = arith.constant 0 : index
    %101 = vector.load %arg4[%c7, %c0_51] : memref<8x64xf32, #tpu.memory_space<vmem>>, vector<1x32xf32>
    tpu.vector_store %arg4[%c7, %c0_51], %100 {strides = array<i32>} : memref<8x64xf32, #tpu.memory_space<vmem>>, vector<1x32xf32>,
    %102 = arith.index_cast %98 : i32 to index
    %c0_52 = arith.constant 0 : index
    %103 = vector.load %arg3[%102, %c0_52] : memref<128x32xf32, #tpu.memory_space<vmem>>, vector<1x32xf32>
    %c7_53 = arith.constant 7 : index
    %c32_54 = arith.constant 32 : index
    %104 = vector.load %arg4[%c7_53, %c32_54] : memref<8x64xf32, #tpu.memory_space<vmem>>, vector<1x32xf32>
    tpu.vector_store %arg4[%c7_53, %c32_54], %103 {strides = array<i32>} : memref<8x64xf32, #tpu.memory_space<vmem>>, vector<1x32xf32>,
    return
  }
  func.func @transform_0(%arg0: i32, %arg1: memref<16xi32, #tpu.memory_space<smem>>) -> (i32, i32) {
    %c0_i32 = arith.constant 0 : i32
    %c0_i32_0 = arith.constant 0 : i32
    %c0_i32_1 = arith.constant 0 : i32
    return %c0_i32, %c0_i32_0 : i32, i32
  }
  func.func @transform_1(%arg0: i32, %arg1: memref<16xi32, #tpu.memory_space<smem>>) -> (i32, i32) {
    %c0_i32 = arith.constant 0 : i32
    %c0_i32_0 = arith.constant 0 : i32
    %c0_i32_1 = arith.constant 0 : i32
    return %c0_i32, %c0_i32_0 : i32, i32
  }
  func.func @transform_2(%arg0: i32, %arg1: memref<16xi32, #tpu.memory_space<smem>>) -> (i32, i32) {
    %c0_i32 = arith.constant 0 : i32
    %c0_i32_0 = arith.constant 0 : i32
    return %arg0, %c0_i32 : i32, i32
  }
}

</mosaic_0001>

<llo_original>
// kernel: tpu_custom_call.1
$region0: #{tpu_custom_call.1}
  #allocation0 [shape = 'u32[]', space=smem, size = 0x4, offset = 0x4, fixed_abs, tag = 'smem constant byte address 0x4 - core index']
  #allocation1 [shape = 'u32[144,128]{1,0:T(1,128)}', space=vmem, size = 0x12000, scoped, tag = 'internal scratch']
  #allocation2 [shape = 's32[1]{0}', space=sflag, size = 0x4, scoped, tag = 'scoped memory for tpu_custom_call.1']
  #allocation3 [shape = 'u8[512]{0}', space=smem, size = 0x200, scoped, tag = 'prefetched SMEM operand 0']
  %s0 = inlined_call_operand.vmem [shape: s32[16], index: 0, kind: input, shape index: {}]
  %s1 = inlined_call_operand.vmem [shape: f32[64,32], index: 1, kind: input, shape index: {}]
  %s2 = inlined_call_operand.vmem [shape: f32[128,32], index: 2, kind: input, shape index: {}]
  %s3 = inlined_call_operand.hbm [shape: f32[8,64], index: 3, kind: output, shape index: {}]
  %s4 = sld [smem:[#allocation0]]
  $region18: #{tpu_custom_call.1} parent=0
    _
  %s6 = ssub.s32 1, %s4
  %s7 = scalar_select 0, %s6, %s4
  %s8 = sshll.u32 %s0, 4
  %s9 = int_to_ptr.vmem [resolvable:$true] %s8
  %11 = dma.vmem_to_smem %s9, 16, [#allocation3], [#allocation2]
  %12 = dma.done [#allocation2], 16
  %13 = sfence
  $region1: #{tpu_custom_call.1} parent=0
    #allocation4 [shape = 'u8[4096]{0}', space=vmem, size = 0x1000, scoped, tag = 'output window, operand 0, single buffered']
    #allocation5 [shape = 's32[1]{0}', space=sflag, size = 0x4, scoped, tag = 'scoped memory for tpu_custom_call.1']
    %14 = vsyncpa [#allocation5], 0
    // Predicated region
    $region2: #{tpu_custom_call.1} parent=1 // pred_check
      _
    $region3: #{tpu_custom_call.1} parent=1 // pred_check_branch
      %16 = sbr.rel (0) target = $region5
    $region4: #{tpu_custom_call.1} parent=1 // pred_region
      _
    $region5: #{tpu_custom_call.1} parent=1 // pred_fallthru
      _
    // Predicated region
    $region6: #{tpu_custom_call.1} parent=1 // pred_check
      _
    $region7: #{tpu_custom_call.1} parent=1 // pred_check_branch
      %18 = sbr.rel (0) target = $region9
    $region8: #{tpu_custom_call.1} parent=1 // pred_region
      _
    $region9: #{tpu_custom_call.1} parent=1 // pred_fallthru
      _
    %s19 = smul.u32 0, 8
    %s20 = sld [smem:[#allocation3 + %s19]]
    %s21 = sadd.s32 %s19, 8
    %s22 = sld [smem:[#allocation3 + %s21]]
    %s23 = scalar_lea.vmem %s1, %s20
    %v24 = vld [vmem:[%s23] sm:$0x1]
    %vm25 = vcmask 253952
    %26 = vst.msk [vmem:[#allocation4] sm:$0x1] %vm25, %v24
    %s27 = scalar_lea.vmem %s2, %s22
    %v28 = vld [vmem:[%s27] sm:$0x1]
    %30 = vrot.lane.b32.xlu0 %v28, 32
    %v31 = vpop.permute.xlu0 %30
    %vm33 = vcmask 516352
    %34 = vst.msk [vmem:[#allocation4] sm:$0x1] %vm33, %v31
    %s35 = sadd.s32 %s19, 1
    %s36 = sld [smem:[#allocation3 + %s35]]
    %s37 = sadd.s32 %s19, 9
    %s38 = sld [smem:[#allocation3 + %s37]]
    %s39 = scalar_lea.vmem %s1, %s36
    %v40 = vld [vmem:[%s39] sm:$0x1]
    %41 = vst.msk [vmem:[#allocation4 + $0x1] sm:$0x1] %vm25, %v40
    %s42 = scalar_lea.vmem %s2, %s38
    %v43 = vld [vmem:[%s42] sm:$0x1]
    %45 = vrot.lane.b32.xlu0 %v43, 32
    %v46 = vpop.permute.xlu0 %45
    %48 = vst.msk [vmem:[#allocation4 + $0x1] sm:$0x1] %vm33, %v46
    %s49 = sadd.s32 %s19, 2
    %s50 = sld [smem:[#allocation3 + %s49]]
    %s51 = sadd.s32 %s19, 10
    %s52 = sld [smem:[#allocation3 + %s51]]
    %s53 = scalar_lea.vmem %s1, %s50
    %v54 = vld [vmem:[%s53] sm:$0x1]
    %55 = vst.msk [vmem:[#allocation4 + $0x2] sm:$0x1] %vm25, %v54
    %s56 = scalar_lea.vmem %s2, %s52
    %v57 = vld [vmem:[%s56] sm:$0x1]
    %59 = vrot.lane.b32.xlu0 %v57, 32
    %v60 = vpop.permute.xlu0 %59
    %62 = vst.msk [vmem:[#allocation4 + $0x2] sm:$0x1] %vm33, %v60
    %s63 = sadd.s32 %s19, 3
    %s64 = sld [smem:[#allocation3 + %s63]]
    %s65 = sadd.s32 %s19, 11
    %s66 = sld [smem:[#allocation3 + %s65]]
    %s67 = scalar_lea.vmem %s1, %s64
    %v68 = vld [vmem:[%s67] sm:$0x1]
    %69 = vst.msk [vmem:[#allocation4 + $0x3] sm:$0x1] %vm25, %v68
    %s70 = scalar_lea.vmem %s2, %s66
    %v71 = vld [vmem:[%s70] sm:$0x1]
    %73 = vrot.lane.b32.xlu0 %v71, 32
    %v74 = vpop.permute.xlu0 %73
    %76 = vst.msk [vmem:[#allocation4 + $0x3] sm:$0x1] %vm33, %v74
    %s77 = sadd.s32 %s19, 4
    %s78 = sld [smem:[#allocation3 + %s77]]
    %s79 = sadd.s32 %s19, 12
    %s80 = sld [smem:[#allocation3 + %s79]]
    %s81 = scalar_lea.vmem %s1, %s78
    %v82 = vld [vmem:[%s81] sm:$0x1]
    %83 = vst.msk [vmem:[#allocation4 + $0x4] sm:$0x1] %vm25, %v82
    %s84 = scalar_lea.vmem %s2, %s80
    %v85 = vld [vmem:[%s84] sm:$0x1]
    %87 = vrot.lane.b32.xlu0 %v85, 32
    %v88 = vpop.permute.xlu0 %87
    %90 = vst.msk [vmem:[#allocation4 + $0x4] sm:$0x1] %vm33, %v88
    %s91 = sadd.s32 %s19, 5
    %s92 = sld [smem:[#allocation3 + %s91]]
    %s93 = sadd.s32 %s19, 13
    %s94 = sld [smem:[#allocation3 + %s93]]
    %s95 = scalar_lea.vmem %s1, %s92
    %v96 = vld [vmem:[%s95] sm:$0x1]
    %97 = vst.msk [vmem:[#allocation4 + $0x5] sm:$0x1] %vm25, %v96
    %s98 = scalar_lea.vmem %s2, %s94
    %v99 = vld [vmem:[%s98] sm:$0x1]
    %101 = vrot.lane.b32.xlu0 %v99, 32
    %v102 = vpop.permute.xlu0 %101
    %104 = vst.msk [vmem:[#allocation4 + $0x5] sm:$0x1] %vm33, %v102
    %s105 = sadd.s32 %s19, 6
    %s106 = sld [smem:[#allocation3 + %s105]]
    %s107 = sadd.s32 %s19, 14
    %s108 = sld [smem:[#allocation3 + %s107]]
    %s109 = scalar_lea.vmem %s1, %s106
    %v110 = vld [vmem:[%s109] sm:$0x1]
    %111 = vst.msk [vmem:[#allocation4 + $0x6] sm:$0x1] %vm25, %v110
    %s112 = scalar_lea.vmem %s2, %s108
    %v113 = vld [vmem:[%s112] sm:$0x1]
    %115 = vrot.lane.b32.xlu0 %v113, 32
    %v116 = vpop.permute.xlu0 %115
    %118 = vst.msk [vmem:[#allocation4 + $0x6] sm:$0x1] %vm33, %v116
    %s119 = sadd.s32 %s19, 7
    %s120 = sld [smem:[#allocation3 + %s119]]
    %s121 = sadd.s32 %s19, 15
    %s122 = sld [smem:[#allocation3 + %s121]]
    %s123 = scalar_lea.vmem %s1, %s120
    %v124 = vld [vmem:[%s123] sm:$0x1]
    %125 = vst.msk [vmem:[#allocation4 + $0x7] sm:$0x1] %vm25, %v124
    %s126 = scalar_lea.vmem %s2, %s122
    %v127 = vld [vmem:[%s126] sm:$0x1]
    %129 = vrot.lane.b32.xlu0 %v127, 32
    %v130 = vpop.permute.xlu0 %129
    %132 = vst.msk [vmem:[#allocation4 + $0x7] sm:$0x1] %vm33, %v130
    // Predicated region
    $region10: #{tpu_custom_call.1} parent=1 // pred_check
      _
    $region11: #{tpu_custom_call.1} parent=1 // pred_check_branch
      %134 = sbr.rel (0) target = $region13
    $region12: #{tpu_custom_call.1} parent=1 // pred_region
      %s136 = ssub.s32 128, 128
      %137 = vsyncadd [#allocation5], %s136
      %s139 = sshll.u32 [#allocation4], 4
      %s140 = int_to_ptr.vmem [resolvable:$true] %s139
      %142 = dma.vmem_to_hbm [thread:$0]  %s140, 128, %s3, [#allocation5]
    $region13: #{tpu_custom_call.1} parent=1 // pred_fallthru
      _
    // Predicated region
    $region14: #{tpu_custom_call.1} parent=1 // pred_check
      _
    $region15: #{tpu_custom_call.1} parent=1 // pred_check_branch
      %144 = sbr.rel (0) target = $region17
    $region16: #{tpu_custom_call.1} parent=1 // pred_region
      %145 = dma.done [#allocation5], 128
    $region17: #{tpu_custom_call.1} parent=1 // pred_fallthru
      _
    %146 = vsyncpa [#allocation5], 1

</llo_original>
